<compile_context>
chip_gen: v6e
topology: v6e:2x2x1
jax: 0.10.0
libtpu: 0.0.40
codegen_flags: <defaults>
</compile_context>

<pallas_src>
import jax
import jax.numpy as jnp
from jax import lax
from jax.experimental import pallas as pl
from jax.experimental.pallas import tpu as pltpu


def _ceil_to(x, m):
    return ((x + m - 1) // m) * m


# ---------------------------------------------------------------------------
# Kernel 1: conv-as-matmul fused with BN partial statistics.
#   patches (tm, Kp) bf16 @ W (Kp, Ep) bf16 -> conv tile (tm, Ep) f32
#   conv tile is stored bf16; per-tile per-channel sum / sum-of-squares are
#   stored f32.  No row mask: padded rows/columns contribute exactly zero.
# ---------------------------------------------------------------------------
def _matmul_stats_kernel(p_ref, w_ref, o_ref, s1_ref, s2_ref):
    x = jnp.dot(p_ref[...], w_ref[...], preferred_element_type=jnp.float32)
    s1_ref[...] = jnp.sum(x, axis=0, keepdims=True)[None]        # (1, 1, Ep)
    s2_ref[...] = jnp.sum(x * x, axis=0, keepdims=True)[None]    # (1, 1, Ep)
    o_ref[...] = x.astype(o_ref.dtype)


def conv_matmul_stats(patches, w_mat, *, tm):
    m_pad, k_pad = patches.shape
    _, e_pad = w_mat.shape
    nt = m_pad // tm
    # Double-buffered working set (bf16 operands / output, f32 stats) + headroom.
    footprint = 2 * ((tm * k_pad + k_pad * e_pad + tm * e_pad) * 2
                     + 2 * 2 * e_pad * 4)
    vmem_limit = int(min(32 * 1024 * 1024, max(16 * 1024 * 1024, 2 * footprint)))
    conv_out, s1, s2 = pl.pallas_call(
        _matmul_stats_kernel,
        out_shape=(
            jax.ShapeDtypeStruct((m_pad, e_pad), jnp.bfloat16),
            jax.ShapeDtypeStruct((nt, 1, e_pad), jnp.float32),
            jax.ShapeDtypeStruct((nt, 1, e_pad), jnp.float32),
        ),
        grid_spec=pltpu.PrefetchScalarGridSpec(
            num_scalar_prefetch=0,
            grid=(nt,),
            in_specs=[
                pl.BlockSpec((tm, k_pad), lambda i: (i, 0)),       # patch tile
                # Resident weight (constant index_map -> DMA'd once).
                # TODO(synk): pipeline_mode=pl.Buffered(1) would drop the
                # redundant second weight buffer (~k_pad*e_pad*2 bytes).
                pl.BlockSpec((k_pad, e_pad), lambda i: (0, 0)),
            ],
            out_specs=(
                pl.BlockSpec((tm, e_pad), lambda i: (i, 0)),
                pl.BlockSpec((1, 1, e_pad), lambda i: (i, 0, 0)),
                pl.BlockSpec((1, 1, e_pad), lambda i: (i, 0, 0)),
            ),
        ),
        compiler_params=pltpu.CompilerParams(
            dimension_semantics=("parallel",),
            vmem_limit_bytes=vmem_limit,
        ),
    )(patches, w_mat)
    return conv_out, s1, s2


# ---------------------------------------------------------------------------
# Kernel 2: tiled BN affine apply, y = x * scale + shift (per channel).
# Reads the bf16 conv intermediate, computes in f32, and writes only the valid
# E output channels (out block last dim == full array dim) so no extra slice
# pass is needed in the wrapper.
# ---------------------------------------------------------------------------
def _affine_kernel(x_ref, scale_ref, shift_ref, o_ref):
    y = x_ref[...].astype(jnp.float32) * scale_ref[...] + shift_ref[...]
    o_ref[...] = y[:, : o_ref.shape[-1]].astype(o_ref.dtype)


def affine_apply(x, scale, shift, *, tm, out_cols, out_dtype=jnp.float32):
    m_pad, e_pad = x.shape
    nt = m_pad // tm
    footprint = 2 * (tm * e_pad * 2 + tm * out_cols * 4) + 2 * 2 * e_pad * 4
    vmem_limit = int(min(32 * 1024 * 1024, max(16 * 1024 * 1024, 2 * footprint)))
    return pl.pallas_call(
        _affine_kernel,
        out_shape=jax.ShapeDtypeStruct((m_pad, out_cols), out_dtype),
        grid_spec=pltpu.PrefetchScalarGridSpec(
            num_scalar_prefetch=0,
            grid=(nt,),
            in_specs=[
                pl.BlockSpec((tm, e_pad), lambda i: (i, 0)),
                pl.BlockSpec((1, e_pad), lambda i: (0, 0)),
                pl.BlockSpec((1, e_pad), lambda i: (0, 0)),
            ],
            out_specs=pl.BlockSpec((tm, out_cols), lambda i: (i, 0)),
        ),
        compiler_params=pltpu.CompilerParams(
            dimension_semantics=("parallel",),
            vmem_limit_bytes=vmem_limit,
        ),
    )(x, scale, shift)


# ---------------------------------------------------------------------------
# Glue: im2col for the strided, padded 3-D convolution (plain JAX gathers).
# TODO(synk): move into the kernel via manual DMA to avoid the ~(k/stride)^3
# HBM inflation of the patches array.
# ---------------------------------------------------------------------------
def _im2col_3d(x, k, s, p):
    # x: (N, C, D, H, W)  ->  patches (N*Do*Ho*Wo, C*k*k*k)
    N, C, D, H, W = x.shape
    xp = jnp.pad(x, ((0, 0), (0, 0), (p, p), (p, p), (p, p)))
    Do = (D + 2 * p - k) // s + 1
    Ho = (H + 2 * p - k) // s + 1
    Wo = (W + 2 * p - k) // s + 1
    d_idx = (jnp.arange(Do)[:, None] * s + jnp.arange(k)[None, :]).reshape(-1)
    h_idx = (jnp.arange(Ho)[:, None] * s + jnp.arange(k)[None, :]).reshape(-1)
    w_idx = (jnp.arange(Wo)[:, None] * s + jnp.arange(k)[None, :]).reshape(-1)
    Dp, Hp, Wp = xp.shape[2], xp.shape[3], xp.shape[4]
    xg = jnp.take(xp, d_idx, axis=2).reshape(N, C, Do, k, Hp, Wp)
    xg = jnp.take(xg, h_idx, axis=4).reshape(N, C, Do, k, Ho, k, Wp)
    xg = jnp.take(xg, w_idx, axis=6).reshape(N, C, Do, k, Ho, k, Wo, k)
    # -> (N, Do, Ho, Wo, C, kd, kh, kw)
    xg = jnp.transpose(xg, (0, 2, 4, 6, 1, 3, 5, 7))
    patches = xg.reshape(N * Do * Ho * Wo, C * k * k * k)
    return patches, Do, Ho, Wo


# ---------------------------------------------------------------------------
# Module forward: OverlapPatchEmbed3D(x) -> (tokens, D, H, W)
# ---------------------------------------------------------------------------
def overlap_patch_embed_3d(x, params, *, patch_size, stride, eps=1e-5):
    N = x.shape[0]
    k = patch_size
    p = patch_size // 2
    E = params["w"].shape[0]

    # im2col in bf16 (halves HBM traffic of the inflated patches array).
    # NOTE: conv therefore runs bf16 x bf16 -> f32; small precision delta vs
    # the f32 reference, well within tolerance.
    patches, Do, Ho, Wo = _im2col_3d(x.astype(jnp.bfloat16), k, stride, p)
    M, K = patches.shape

    # Lane / contraction padding (multiples of 128) and M tiling.
    e_pad = _ceil_to(max(E, 128), 128)
    k_pad = _ceil_to(K, 128)
    # Big tiles amortize per-step overhead; keep >= 2 grid steps when M allows
    # so the "parallel" M axis can shard across v7x's two TensorCores.
    tm = min(1024, _ceil_to(M, 8))
    if _ceil_to(M, tm) // tm < 2 and M > 8:
        tm = _ceil_to(pl.cdiv(M, 2), 8)
    m_pad = _ceil_to(M, tm)

    patches = jnp.pad(patches, ((0, m_pad - M), (0, k_pad - K)))
    w_mat = params["w"].reshape(E, K).T.astype(jnp.bfloat16)       # (K, E)
    w_mat = jnp.pad(w_mat, ((0, k_pad - K), (0, e_pad - E)))

    # NOTE: the Conv3d bias is intentionally NOT added — training-mode BN
    # subtracts the per-channel batch mean, so it cancels exactly.
    conv_out, s1, s2 = conv_matmul_stats(patches, w_mat, tm=tm)

    # Reduce per-tile partial stats (tiny E-sized math) and build scale/shift.
    sum1 = jnp.sum(s1[:, 0, :], axis=0)                            # (e_pad,)
    sum2 = jnp.sum(s2[:, 0, :], axis=0)                            # (e_pad,)
    mean = sum1 / M
    var = jnp.maximum(sum2 / M - mean * mean, 0.0)                 # biased, like torch
    inv = lax.rsqrt(var + eps)
    gamma = jnp.pad(params["gamma"].astype(jnp.float32), (0, e_pad - E))
    beta = jnp.pad(params["beta"].astype(jnp.float32), (0, e_pad - E))
    scale = (gamma * inv).reshape(1, e_pad)
    shift = (beta - mean * gamma * inv).reshape(1, e_pad)

    y = affine_apply(conv_out, scale, shift, tm=tm, out_cols=E)
    # Row slice is a no-op when m_pad == M; reshape is free (contiguous).
    tokens = y[:M].reshape(N, Do * Ho * Wo, E)   # == flatten(2).transpose(1,2)
    return tokens, Do, Ho, Wo


# ---------------------------------------------------------------------------
# Pure-JAX f32 reference (for a sanity check)
# ---------------------------------------------------------------------------
def _reference(x, params, *, patch_size, stride):
    p = patch_size // 2
    y = lax.conv_general_dilated(
        x, params["w"],
        window_strides=(stride, stride, stride),
        padding=[(p, p)] * 3,
        dimension_numbers=("NCDHW", "OIDHW", "NCDHW"),
    ) + params["b"].reshape(1, -1, 1, 1, 1)
    N, E, Do, Ho, Wo = y.shape
    mean = jnp.mean(y, axis=(0, 2, 3, 4), keepdims=True)
    var = jnp.mean((y - mean) ** 2, axis=(0, 2, 3, 4), keepdims=True)
    y = (y - mean) * lax.rsqrt(var + 1e-5)
    y = y * params["gamma"].reshape(1, -1, 1, 1, 1) + params["beta"].reshape(1, -1, 1, 1, 1)
    tokens = jnp.transpose(y.reshape(N, E, Do * Ho * Wo), (0, 2, 1))
    return tokens, Do, Ho, Wo


if __name__ == "__main__":
    # Small shapes consistent with the module's forward.
    N, C, D, H, W = 2, 3, 8, 8, 8
    patch_size, stride, embed_dim = 7, 4, 32

    key = jax.random.PRNGKey(0)
    kx, kw, kb = jax.random.split(key, 3)
    x = jax.random.normal(kx, (N, C, D, H, W), dtype=jnp.float32)

    fan_in = C * patch_size ** 3
    params = {
        # Conv3d weight (E, C, kd, kh, kw) and bias (E,)
        "w": jax.random.normal(kw, (embed_dim, C, patch_size, patch_size, patch_size),
                               dtype=jnp.float32) * (1.0 / jnp.sqrt(fan_in)),
        "b": jax.random.normal(kb, (embed_dim,), dtype=jnp.float32) * 0.1,
        # SyncBatchNorm affine params (PyTorch default init: weight=1, bias=0)
        "gamma": jnp.ones((embed_dim,), dtype=jnp.float32),
        "beta": jnp.zeros((embed_dim,), dtype=jnp.float32),
    }

    tokens, Do, Ho, Wo = overlap_patch_embed_3d(
        x, params, patch_size=patch_size, stride=stride)
    tokens = jax.block_until_ready(tokens)

    ref_tokens, rDo, rHo, rWo = _reference(
        x, params, patch_size=patch_size, stride=stride)
    assert (Do, Ho, Wo) == (rDo, rHo, rWo)
    assert tokens.shape == (N, Do * Ho * Wo, embed_dim)
    assert jnp.allclose(tokens, ref_tokens, atol=5e-2, rtol=5e-2)

    print("KERNEL_OK")
</pallas_src>

<mosaic_0001>
module attributes {stable_mosaic.version = 11 : i64} {
  func.func @_matmul_stats_kernel(%arg0: i32, %arg1: memref<8x1152xbf16, #tpu.memory_space<vmem>>, %arg2: memref<1152x128xbf16, #tpu.memory_space<vmem>>, %arg3: memref<8x128xbf16, #tpu.memory_space<vmem>>, %arg4: memref<1x1x128xf32, #tpu.memory_space<vmem>>, %arg5: memref<1x1x128xf32, #tpu.memory_space<vmem>>) attributes {dimension_semantics = [#tpu.dimension_semantics<parallel>], iteration_bounds = array<i64: 2>, scalar_prefetch = 0 : i64, scratch_operands = 0 : i64, tpu.core_type = #tpu.core_type<tc>, window_params = [{transform_indices = @transform_0, window_bounds = array<i64: 8, 1152>}, {pipeline_mode = #tpu.pipeline_mode<synchronous>, transform_indices = @transform_1, window_bounds = array<i64: 1152, 128>}, {transform_indices = @transform_2, window_bounds = array<i64: 8, 128>}, {transform_indices = @transform_3, window_bounds = array<i64: 1, 1, 128>}, {transform_indices = @transform_4, window_bounds = array<i64: 1, 1, 128>}]} {
    %c0 = arith.constant 0 : index
    %c0_0 = arith.constant 0 : index
    %0 = vector.load %arg1[%c0, %c0_0] : memref<8x1152xbf16, #tpu.memory_space<vmem>>, vector<8x1152xbf16>
    %c0_1 = arith.constant 0 : index
    %c0_2 = arith.constant 0 : index
    %1 = vector.load %arg2[%c0_1, %c0_2] : memref<1152x128xbf16, #tpu.memory_space<vmem>>, vector<1152x128xbf16>
    %cst = arith.constant dense<0.000000e+00> : vector<8x128xf32>
    %2 = tpu.matmul %0, %1, %cst {dimension_numbers = #tpu.dot_dimension_numbers<[1], [0], [0], [1], [0, 0, 1, 1], [], []>} : vector<8x1152xbf16>, vector<1152x128xbf16>, vector<8x128xf32> -> vector<8x128xf32>
    %cst_3 = arith.constant dense<0.000000e+00> : vector<128xf32>
    %3 = vector.multi_reduction <add>, %2, %cst_3 [0] : vector<8x128xf32> to vector<128xf32>
    %4 = vector.shape_cast %3 : vector<128xf32> to vector<1x128xf32>
    %5 = vector.shape_cast %4 : vector<1x128xf32> to vector<1x1x128xf32>
    %c0_4 = arith.constant 0 : index
    %c0_5 = arith.constant 0 : index
    %c0_6 = arith.constant 0 : index
    %6 = vector.load %arg4[%c0_4, %c0_5, %c0_6] : memref<1x1x128xf32, #tpu.memory_space<vmem>>, vector<1x1x128xf32>
    tpu.vector_store %arg4[%c0_4, %c0_5, %c0_6], %5 {strides = array<i32>} : memref<1x1x128xf32, #tpu.memory_space<vmem>>, vector<1x1x128xf32>,
    %7 = arith.mulf %2, %2 : vector<8x128xf32>
    %cst_7 = arith.constant dense<0.000000e+00> : vector<128xf32>
    %8 = vector.multi_reduction <add>, %7, %cst_7 [0] : vector<8x128xf32> to vector<128xf32>
    %9 = vector.shape_cast %8 : vector<128xf32> to vector<1x128xf32>
    %10 = vector.shape_cast %9 : vector<1x128xf32> to vector<1x1x128xf32>
    %c0_8 = arith.constant 0 : index
    %c0_9 = arith.constant 0 : index
    %c0_10 = arith.constant 0 : index
    %11 = vector.load %arg5[%c0_8, %c0_9, %c0_10] : memref<1x1x128xf32, #tpu.memory_space<vmem>>, vector<1x1x128xf32>
    tpu.vector_store %arg5[%c0_8, %c0_9, %c0_10], %10 {strides = array<i32>} : memref<1x1x128xf32, #tpu.memory_space<vmem>>, vector<1x1x128xf32>,
    %12 = arith.truncf %2 : vector<8x128xf32> to vector<8x128xbf16>
    %c0_11 = arith.constant 0 : index
    %c0_12 = arith.constant 0 : index
    %13 = vector.load %arg3[%c0_11, %c0_12] : memref<8x128xbf16, #tpu.memory_space<vmem>>, vector<8x128xbf16>
    tpu.vector_store %arg3[%c0_11, %c0_12], %12 {strides = array<i32>} : memref<8x128xbf16, #tpu.memory_space<vmem>>, vector<8x128xbf16>,
    return
  }
  func.func @transform_0(%arg0: i32) -> (i32, i32) {
    %c0_i32 = arith.constant 0 : i32
    %c0_i32_0 = arith.constant 0 : i32
    return %arg0, %c0_i32 : i32, i32
  }
  func.func @transform_1(%arg0: i32) -> (i32, i32) {
    %c0_i32 = arith.constant 0 : i32
    %c0_i32_0 = arith.constant 0 : i32
    %c0_i32_1 = arith.constant 0 : i32
    return %c0_i32, %c0_i32_0 : i32, i32
  }
  func.func @transform_2(%arg0: i32) -> (i32, i32) {
    %c0_i32 = arith.constant 0 : i32
    %c0_i32_0 = arith.constant 0 : i32
    return %arg0, %c0_i32 : i32, i32
  }
  func.func @transform_3(%arg0: i32) -> (i32, i32, i32) {
    %c0_i32 = arith.constant 0 : i32
    %c0_i32_0 = arith.constant 0 : i32
    %c0_i32_1 = arith.constant 0 : i32
    return %arg0, %c0_i32, %c0_i32_0 : i32, i32, i32
  }
  func.func @transform_4(%arg0: i32) -> (i32, i32, i32) {
    %c0_i32 = arith.constant 0 : i32
    %c0_i32_0 = arith.constant 0 : i32
    %c0_i32_1 = arith.constant 0 : i32
    return %arg0, %c0_i32, %c0_i32_0 : i32, i32, i32
  }
}

</mosaic_0001>

<llo_original>
// kernel: tpu_custom_call.1
$region0: #{tpu_custom_call.1}
  #allocation0 [shape = 'u32[]', space=smem, size = 0x4, offset = 0x4, fixed_abs, tag = 'smem constant byte address 0x4 - core index']
  #allocation1 [shape = 'u32[144,128]{1,0:T(1,128)}', space=vmem, size = 0x12000, scoped, tag = 'internal scratch']
  %s0 = inlined_call_operand.hbm [shape: bf16[16,1152], index: 0, kind: input, shape index: {}]
  %s1 = inlined_call_operand.hbm [shape: bf16[1152,128], index: 1, kind: input, shape index: {}]
  %s2 = inlined_call_operand.hbm [shape: bf16[16,128], index: 2, kind: output, shape index: {0}]
  %s3 = inlined_call_operand.hbm [shape: f32[2,1,128], index: 3, kind: output, shape index: {1}]
  %s4 = inlined_call_operand.hbm [shape: f32[2,1,128], index: 4, kind: output, shape index: {2}]
  %5 = xla_tuple %s2, %s3, %s4
  %s6 = sld [smem:[#allocation0]]
  $region65: #{tpu_custom_call.1} parent=0
    _
  %s8 = ssub.s32 1, %s6
  %s9 = scalar_select 0, %s8, %s6
  $region1: #{tpu_custom_call.1} parent=0
    #allocation2 [shape = 'u8[36864]{0}', space=vmem, size = 0x9000, scoped, tag = 'input window, operand 0']
    #allocation3 [shape = 's32[2]{0}', space=sflag, size = 0x8, scoped, tag = 'scoped memory for tpu_custom_call.1']
    #allocation4 [shape = 's32[2]{0}', space=sflag, size = 0x8, scoped, tag = 'scoped memory for tpu_custom_call.1']
    #allocation5 [shape = 'u8[294912]{0}', space=vmem, size = 0x48000, scoped, tag = 'input window, operand 1, single buffered']
    #allocation6 [shape = 's32[1]{0}', space=sflag, size = 0x4, scoped, tag = 'scoped memory for tpu_custom_call.1']
    #allocation7 [shape = 'u8[4096]{0}', space=vmem, size = 0x1000, scoped, tag = 'output window, operand 0']
    #allocation8 [shape = 'u8[1024]{0}', space=vmem, size = 0x400, scoped, tag = 'output window, operand 1']
    #allocation9 [shape = 's32[2]{0}', space=sflag, size = 0x8, scoped, tag = 'scoped memory for tpu_custom_call.1']
    #allocation10 [shape = 'u8[1024]{0}', space=vmem, size = 0x400, scoped, tag = 'output window, operand 2']
    %10 = vsyncpa [#allocation3], 0
    %s11 = scalar_lea.sflag [#allocation3], 1
    %12 = vsyncpa %s11, 0
    %13 = vsyncpa [#allocation6], 0
    %14 = vsyncpa [#allocation4], 0
    %s15 = scalar_lea.sflag [#allocation4], 1
    %16 = vsyncpa %s15, 0
    %17 = vsyncpa [#allocation9], 0
    %s18 = scalar_lea.sflag [#allocation9], 1
    %19 = vsyncpa %s18, 0
    loop: start=0, step=1, limit=4
    $region2: #{tpu_custom_call.1} parent=1 // loop_pre_header
      _
    $region3: #{tpu_custom_call.1} parent=1 // loop_header
      %s21 = sphi 0, %s25
      %p22 = scmp.ge.s32.totalorder %s21, 4
      %s31 = sphi 0, %s33
      %s34 = sphi 0, %s31
      %s35 = sphi 0, %s34
      %s51 = sphi 0, %s35
      %s55 = sphi 0, %s55
      %s57 = sphi 0, %s55
      %s58 = sphi 0, %s57
      %s72 = sphi 0, %s58
      %s78 = sphi 0, %s80
      %s81 = sphi 0, %s78
      %s82 = sphi 0, %s81
      %s98 = sphi 0, %s82
      %s104 = sphi 0, %s106
      %s107 = sphi 0, %s104
      %s108 = sphi 0, %s107
      %s124 = sphi 0, %s108
      %s130 = sphi 0, %s132
      %s133 = sphi 0, %s130
      %s134 = sphi 0, %s133
      %s150 = sphi 0, %s134
    $region4: #{tpu_custom_call.1} parent=1 // loop_header_branch
      %24 = sbr.rel (%p22) target = $region8
    $region5: #{tpu_custom_call.1} parent=1 // loop_body
      %s26 = ssub.s32 %s21, 1
      %s27 = ssub.s32 %s21, 2
      %s28 = sadd.s32 %s21, 1
      %s29 = ssub.s32 %s21, %s28
      %p30 = scmp.eq.s32.totalorder %s29, 0
      %s32 = sadd.s32 %s31, 1
      %s33 = scalar_select %p30, %s31, %s32
      %p36 = pneg %p30
      %p37 = scmp.eq.s32.totalorder %s21, 1
      %p38 = por %p36, %p37
      %p39 = scmp.ne.s32.totalorder %s31, %s34
      %p40 = scmp.eq.s32.totalorder %s21, 0
      %p41 = por %p39, %p40
      %p42 = scmp.ne.s32.totalorder %s31, %s34
      %p43 = scmp.eq.s32.totalorder %s26, 1
      %p44 = por %p42, %p43
      %p45 = scmp.ne.s32.totalorder %s34, %s35
      %p46 = scmp.eq.s32.totalorder %s26, 0
      %p47 = por %p45, %p46
      %p48 = scmp.ne.s32.totalorder %s34, %s35
      %p49 = scmp.eq.s32.totalorder %s27, 1
      %p50 = por %p48, %p49
      %p52 = scmp.ne.s32.totalorder %s35, %s51
      %p53 = scmp.eq.s32.totalorder %s27, 0
      %p54 = por %p52, %p53
      %s56 = sadd.s32 %s55, 1
      %p59 = scmp.eq.s32.totalorder %s21, 1
      %p60 = scmp.ne.s32.totalorder %s55, %s57
      %p61 = scmp.eq.s32.totalorder %s21, 0
      %p62 = por %p60, %p61
      %p63 = scmp.ne.s32.totalorder %s55, %s57
      %p64 = scmp.eq.s32.totalorder %s26, 1
      %p65 = por %p63, %p64
      %p66 = scmp.ne.s32.totalorder %s57, %s58
      %p67 = scmp.eq.s32.totalorder %s26, 0
      %p68 = por %p66, %p67
      %p69 = scmp.ne.s32.totalorder %s57, %s58
      %p70 = scmp.eq.s32.totalorder %s27, 1
      %p71 = por %p69, %p70
      %p73 = scmp.ne.s32.totalorder %s58, %s72
      %p74 = scmp.eq.s32.totalorder %s27, 0
      %p75 = por %p73, %p74
      %s76 = ssub.s32 %s21, %s28
      %p77 = scmp.eq.s32.totalorder %s76, 0
      %s79 = sadd.s32 %s78, 1
      %s80 = scalar_select %p77, %s78, %s79
      %p83 = pneg %p77
      %p84 = scmp.eq.s32.totalorder %s21, 1
      %p85 = por %p83, %p84
      %p86 = scmp.ne.s32.totalorder %s78, %s81
      %p87 = scmp.eq.s32.totalorder %s21, 0
      %p88 = por %p86, %p87
      %p89 = scmp.ne.s32.totalorder %s78, %s81
      %p90 = scmp.eq.s32.totalorder %s26, 1
      %p91 = por %p89, %p90
      %p92 = scmp.ne.s32.totalorder %s81, %s82
      %p93 = scmp.eq.s32.totalorder %s26, 0
      %p94 = por %p92, %p93
      %p95 = scmp.ne.s32.totalorder %s81, %s82
      %p96 = scmp.eq.s32.totalorder %s27, 1
      %p97 = por %p95, %p96
      %p99 = scmp.ne.s32.totalorder %s82, %s98
      %p100 = scmp.eq.s32.totalorder %s27, 0
      %p101 = por %p99, %p100
      %s102 = ssub.s32 %s21, %s28
      %p103 = scmp.eq.s32.totalorder %s102, 0
      %s105 = sadd.s32 %s104, 1
      %s106 = scalar_select %p103, %s104, %s105
      %p109 = pneg %p103
      %p110 = scmp.eq.s32.totalorder %s21, 1
      %p111 = por %p109, %p110
      %p112 = scmp.ne.s32.totalorder %s104, %s107
      %p113 = scmp.eq.s32.totalorder %s21, 0
      %p114 = por %p112, %p113
      %p115 = scmp.ne.s32.totalorder %s104, %s107
      %p116 = scmp.eq.s32.totalorder %s26, 1
      %p117 = por %p115, %p116
      %p118 = scmp.ne.s32.totalorder %s107, %s108
      %p119 = scmp.eq.s32.totalorder %s26, 0
      %p120 = por %p118, %p119
      %p121 = scmp.ne.s32.totalorder %s107, %s108
      %p122 = scmp.eq.s32.totalorder %s27, 1
      %p123 = por %p121, %p122
      %p125 = scmp.ne.s32.totalorder %s108, %s124
      %p126 = scmp.eq.s32.totalorder %s27, 0
      %p127 = por %p125, %p126
      %s128 = ssub.s32 %s21, %s28
      %p129 = scmp.eq.s32.totalorder %s128, 0
      %s131 = sadd.s32 %s130, 1
      %s132 = scalar_select %p129, %s130, %s131
      %p135 = pneg %p129
      %p136 = scmp.eq.s32.totalorder %s21, 1
      %p137 = por %p135, %p136
      %p138 = scmp.ne.s32.totalorder %s130, %s133
      %p139 = scmp.eq.s32.totalorder %s21, 0
      %p140 = por %p138, %p139
      %p141 = scmp.ne.s32.totalorder %s130, %s133
      %p142 = scmp.eq.s32.totalorder %s26, 1
      %p143 = por %p141, %p142
      %p144 = scmp.ne.s32.totalorder %s133, %s134
      %p145 = scmp.eq.s32.totalorder %s26, 0
      %p146 = por %p144, %p145
      %p147 = scmp.ne.s32.totalorder %s133, %s134
      %p148 = scmp.eq.s32.totalorder %s27, 1
      %p149 = por %p147, %p148
      %p151 = scmp.ne.s32.totalorder %s134, %s150
      %p152 = scmp.eq.s32.totalorder %s27, 0
      %p153 = por %p151, %p152
      %p154 = scmp.le.s32.totalorder 1, %s21
      %p155 = scmp.lt.s32.totalorder %s21, 3
      %p156 = pnand %p154, %p155
      %p157 = pneg %p156
      // Predicated region
      $region9: #{tpu_custom_call.1} parent=5 // pred_check
        _
      $region10: #{tpu_custom_call.1} parent=5 // pred_check_branch
        %159 = sbr.rel (%p156) target = $region12
      $region11: #{tpu_custom_call.1} parent=5 // pred_region
        %s160 = ssub.s32 %s21, 1
        // Predicated region
        $region13: #{tpu_custom_call.1} parent=11 // pred_check
          %p161 = pneg %p68
        $region14: #{tpu_custom_call.1} parent=11 // pred_check_branch
          %163 = sbr.rel (%p161) target = $region16
        $region15: #{tpu_custom_call.1} parent=11 // pred_region
          %s165 = ssub.s32 9216, 9216
          %166 = vsyncadd [#allocation6], %s165
          %s167 = sshll.u32 [#allocation5], 4
          %s168 = int_to_ptr.vmem [resolvable:$true] %s167
          %173 = dma.hbm_to_vmem [thread:$0]  %s1, 9216, %s168, [#allocation6], 64, 64, 4
        $region16: #{tpu_custom_call.1} parent=11 // pred_fallthru
          _
      $region12: #{tpu_custom_call.1} parent=5 // pred_fallthru
        _
      %p174 = scmp.lt.s32.totalorder %s21, 2
      // Predicated region
      $region17: #{tpu_custom_call.1} parent=5 // pred_check
        %p175 = pneg %p174
      $region18: #{tpu_custom_call.1} parent=5 // pred_check_branch
        %177 = sbr.rel (%p175) target = $region20
      $region19: #{tpu_custom_call.1} parent=5 // pred_region
        // Predicated region
        $region21: #{tpu_custom_call.1} parent=19 // pred_check
          %p178 = pneg %p41
        $region22: #{tpu_custom_call.1} parent=19 // pred_check_branch
          %180 = sbr.rel (%p178) target = $region24
        $region23: #{tpu_custom_call.1} parent=19 // pred_region
          %s181 = sand.u32 %s31, 1
          %s182 = scalar_lea.sflag [#allocation3], %s181
          %s183 = sand.u32 %s31, 1
          %s184 = smul.addr %s183, 36
          %s185 = scalar_lea.vmem [#allocation2], %s184
          %s187 = ssub.s32 576, 576
          %188 = vsyncadd %s182, %s187
          %s189 = smul.addr %s21, 9
          %s190 = smul.addr %s189, 64
          %s191 = scalar_lea.hbm %s0, %s190
          %s193 = sshll.u32 %s185, 4
          %s194 = int_to_ptr.vmem [resolvable:$true] %s193
          %196 = dma.hbm_to_vmem [thread:$0]  %s191, 576, %s194, %s182
        $region24: #{tpu_custom_call.1} parent=19 // pred_fallthru
          _
      $region20: #{tpu_custom_call.1} parent=5 // pred_fallthru
        _
      %p197 = scmp.le.s32.totalorder 1, %s21
      %p198 = scmp.lt.s32.totalorder %s21, 3
      %p199 = pnand %p197, %p198
      %p200 = pneg %p199
      // Predicated region
      $region25: #{tpu_custom_call.1} parent=5 // pred_check
        _
      $region26: #{tpu_custom_call.1} parent=5 // pred_check_branch
        %202 = sbr.rel (%p199) target = $region28
      $region27: #{tpu_custom_call.1} parent=5 // pred_region
        %s203 = ssub.s32 %s21, 1
        %s204 = sand.u32 %s34, 1
        %s205 = scalar_lea.sflag [#allocation3], %s204
        %s206 = sand.u32 %s34, 1
        %s207 = smul.addr %s206, 36
        %s208 = scalar_lea.vmem [#allocation2], %s207
        // Predicated region
        $region29: #{tpu_custom_call.1} parent=27 // pred_check
          %p209 = pneg %p47
        $region30: #{tpu_custom_call.1} parent=27 // pred_check_branch
          %211 = sbr.rel (%p209) target = $region32
        $region31: #{tpu_custom_call.1} parent=27 // pred_region
          %212 = dma.done %s205, 576
        $region32: #{tpu_custom_call.1} parent=27 // pred_fallthru
          _
        // Predicated region
        $region33: #{tpu_custom_call.1} parent=27 // pred_check
          %p213 = pneg %p68
        $region34: #{tpu_custom_call.1} parent=27 // pred_check_branch
          %215 = sbr.rel (%p213) target = $region36
        $region35: #{tpu_custom_call.1} parent=27 // pred_region
          %216 = dma.done [#allocation6], 9216
        $region36: #{tpu_custom_call.1} parent=27 // pred_fallthru
          _
        %s217 = sand.u32 %s34, 1
        %s218 = scalar_lea.sflag [#allocation3], %s217
        %s219 = sand.u32 %s34, 1
        %s220 = smul.addr %s219, 36
        %s221 = scalar_lea.vmem [#allocation2], %s220
        %p222 = pneg %p47
        %p223 = pneg %p44
        %p224 = pneg %p68
        %p225 = pneg %p65
        %p226 = pneg %p94
        %p227 = pneg %p91
        %s228 = sand.u32 %s81, 1
        %s229 = scalar_lea.sflag [#allocation4], %s228
        %s230 = sand.u32 %s81, 1
        %s231 = smul.addr %s230, 4
        %s232 = scalar_lea.vmem [#allocation7], %s231
        %p233 = pneg %p120
        %p234 = pneg %p117
        %s235 = sand.u32 %s26, 1
        %s236 = scalar_lea.sflag [#allocation9], %s235
        %s237 = sand.u32 %s107, 1
        %s238 = scalar_lea.vmem [#allocation8], %s237
        %p239 = pneg %p146
        %p240 = pneg %p143
        %s241 = sand.u32 %s26, 1
        %s242 = scalar_lea.sflag [#allocation9], %s241
        %s243 = sand.u32 %s133, 1
        %s244 = scalar_lea.vmem [#allocation10], %s243
        %v246 = vld [vmem:[%s208] sm:$0xff]
        %v247 = vld [vmem:[%s208 + $0x8] sm:$0xff]
        %v248 = vld [vmem:[%s208 + $0x10] sm:$0xff]
        %v249 = vld [vmem:[%s208 + $0x18] sm:$0xff]
        %v250 = vld [vmem:[%s208 + $0x20] sm:$0xf]
        %v251 = vld [vmem:[#allocation5] sm:$0xf]
        %v252 = vld [vmem:[#allocation5 + $0x4] sm:$0xf]
        %v253 = vld [vmem:[#allocation5 + $0x8] sm:$0xf]
        %v254 = vld [vmem:[#allocation5 + $0xc] sm:$0xf]
        %v255 = vld [vmem:[#allocation5 + $0x10] sm:$0xf]
        %v256 = vld [vmem:[#allocation5 + $0x14] sm:$0xf]
        %v257 = vld [vmem:[#allocation5 + $0x18] sm:$0xf]
        %v258 = vld [vmem:[#allocation5 + $0x1c] sm:$0xf]
        %v259 = vld [vmem:[#allocation5 + $0x20] sm:$0xf]
        %v260 = vld [vmem:[#allocation5 + $0x24] sm:$0xf]
        %v261 = vld [vmem:[#allocation5 + $0x28] sm:$0xf]
        %v262 = vld [vmem:[#allocation5 + $0x2c] sm:$0xf]
        %v263 = vld [vmem:[#allocation5 + $0x30] sm:$0xf]
        %v264 = vld [vmem:[#allocation5 + $0x34] sm:$0xf]
        %v265 = vld [vmem:[#allocation5 + $0x38] sm:$0xf]
        %v266 = vld [vmem:[#allocation5 + $0x3c] sm:$0xf]
        %v267 = vld [vmem:[#allocation5 + $0x40] sm:$0xf]
        %v268 = vld [vmem:[#allocation5 + $0x44] sm:$0xf]
        %v269 = vld [vmem:[#allocation5 + $0x48] sm:$0xf]
        %v270 = vld [vmem:[#allocation5 + $0x4c] sm:$0xf]
        %v271 = vld [vmem:[#allocation5 + $0x50] sm:$0xf]
        %v272 = vld [vmem:[#allocation5 + $0x54] sm:$0xf]
        %v273 = vld [vmem:[#allocation5 + $0x58] sm:$0xf]
        %v274 = vld [vmem:[#allocation5 + $0x5c] sm:$0xf]
        %v275 = vld [vmem:[#allocation5 + $0x60] sm:$0xf]
        %v276 = vld [vmem:[#allocation5 + $0x64] sm:$0xf]
        %v277 = vld [vmem:[#allocation5 + $0x68] sm:$0xf]
        %v278 = vld [vmem:[#allocation5 + $0x6c] sm:$0xf]
        %v279 = vld [vmem:[#allocation5 + $0x70] sm:$0xf]
        %v280 = vld [vmem:[#allocation5 + $0x74] sm:$0xf]
        %v281 = vld [vmem:[#allocation5 + $0x78] sm:$0xf]
        %v282 = vld [vmem:[#allocation5 + $0x7c] sm:$0xf]
        %v283 = vld [vmem:[#allocation5 + $0x80] sm:$0xf]
        %v284 = vld [vmem:[#allocation5 + $0x84] sm:$0xf]
        %v285 = vld [vmem:[#allocation5 + $0x88] sm:$0xf]
        %v286 = vld [vmem:[#allocation5 + $0x8c] sm:$0xf]
        %v287 = vld [vmem:[#allocation5 + $0x90] sm:$0xf]
        %v288 = vld [vmem:[#allocation5 + $0x94] sm:$0xf]
        %v289 = vld [vmem:[#allocation5 + $0x98] sm:$0xf]
        %v290 = vld [vmem:[#allocation5 + $0x9c] sm:$0xf]
        %v291 = vld [vmem:[#allocation5 + $0xa0] sm:$0xf]
        %v292 = vld [vmem:[#allocation5 + $0xa4] sm:$0xf]
        %v293 = vld [vmem:[#allocation5 + $0xa8] sm:$0xf]
        %v294 = vld [vmem:[#allocation5 + $0xac] sm:$0xf]
        %v295 = vld [vmem:[#allocation5 + $0xb0] sm:$0xf]
        %v296 = vld [vmem:[#allocation5 + $0xb4] sm:$0xf]
        %v297 = vld [vmem:[#allocation5 + $0xb8] sm:$0xf]
        %v298 = vld [vmem:[#allocation5 + $0xbc] sm:$0xf]
        %v299 = vld [vmem:[#allocation5 + $0xc0] sm:$0xf]
        %v300 = vld [vmem:[#allocation5 + $0xc4] sm:$0xf]
        %v301 = vld [vmem:[#allocation5 + $0xc8] sm:$0xf]
        %v302 = vld [vmem:[#allocation5 + $0xcc] sm:$0xf]
        %v303 = vld [vmem:[#allocation5 + $0xd0] sm:$0xf]
        %v304 = vld [vmem:[#allocation5 + $0xd4] sm:$0xf]
        %v305 = vld [vmem:[#allocation5 + $0xd8] sm:$0xf]
        %v306 = vld [vmem:[#allocation5 + $0xdc] sm:$0xf]
        %v307 = vld [vmem:[#allocation5 + $0xe0] sm:$0xf]
        %v308 = vld [vmem:[#allocation5 + $0xe4] sm:$0xf]
        %v309 = vld [vmem:[#allocation5 + $0xe8] sm:$0xf]
        %v310 = vld [vmem:[#allocation5 + $0xec] sm:$0xf]
        %v311 = vld [vmem:[#allocation5 + $0xf0] sm:$0xf]
        %v312 = vld [vmem:[#allocation5 + $0xf4] sm:$0xf]
        %v313 = vld [vmem:[#allocation5 + $0xf8] sm:$0xf]
        %v314 = vld [vmem:[#allocation5 + $0xfc] sm:$0xf]
        %v315 = vld [vmem:[#allocation5 + $0x100] sm:$0xf]
        %v316 = vld [vmem:[#allocation5 + $0x104] sm:$0xf]
        %v317 = vld [vmem:[#allocation5 + $0x108] sm:$0xf]
        %v318 = vld [vmem:[#allocation5 + $0x10c] sm:$0xf]
        %v319 = vld [vmem:[#allocation5 + $0x110] sm:$0xf]
        %v320 = vld [vmem:[#allocation5 + $0x114] sm:$0xf]
        %v321 = vld [vmem:[#allocation5 + $0x118] sm:$0xf]
        %v322 = vld [vmem:[#allocation5 + $0x11c] sm:$0xf]
        %v323 = vld [vmem:[#allocation5 + $0x120] sm:$0xf]
        %v324 = vld [vmem:[#allocation5 + $0x124] sm:$0xf]
        %v325 = vld [vmem:[#allocation5 + $0x128] sm:$0xf]
        %v326 = vld [vmem:[#allocation5 + $0x12c] sm:$0xf]
        %v327 = vld [vmem:[#allocation5 + $0x130] sm:$0xf]
        %v328 = vld [vmem:[#allocation5 + $0x134] sm:$0xf]
        %v329 = vld [vmem:[#allocation5 + $0x138] sm:$0xf]
        %v330 = vld [vmem:[#allocation5 + $0x13c] sm:$0xf]
        %v331 = vld [vmem:[#allocation5 + $0x140] sm:$0xf]
        %v332 = vld [vmem:[#allocation5 + $0x144] sm:$0xf]
        %v333 = vld [vmem:[#allocation5 + $0x148] sm:$0xf]
        %v334 = vld [vmem:[#allocation5 + $0x14c] sm:$0xf]
        %v335 = vld [vmem:[#allocation5 + $0x150] sm:$0xf]
        %v336 = vld [vmem:[#allocation5 + $0x154] sm:$0xf]
        %v337 = vld [vmem:[#allocation5 + $0x158] sm:$0xf]
        %v338 = vld [vmem:[#allocation5 + $0x15c] sm:$0xf]
        %v339 = vld [vmem:[#allocation5 + $0x160] sm:$0xf]
        %v340 = vld [vmem:[#allocation5 + $0x164] sm:$0xf]
        %v341 = vld [vmem:[#allocation5 + $0x168] sm:$0xf]
        %v342 = vld [vmem:[#allocation5 + $0x16c] sm:$0xf]
        %v343 = vld [vmem:[#allocation5 + $0x170] sm:$0xf]
        %v344 = vld [vmem:[#allocation5 + $0x174] sm:$0xf]
        %v345 = vld [vmem:[#allocation5 + $0x178] sm:$0xf]
        %v346 = vld [vmem:[#allocation5 + $0x17c] sm:$0xf]
        %v347 = vld [vmem:[#allocation5 + $0x180] sm:$0xf]
        %v348 = vld [vmem:[#allocation5 + $0x184] sm:$0xf]
        %v349 = vld [vmem:[#allocation5 + $0x188] sm:$0xf]
        %v350 = vld [vmem:[#allocation5 + $0x18c] sm:$0xf]
        %v351 = vld [vmem:[#allocation5 + $0x190] sm:$0xf]
        %v352 = vld [vmem:[#allocation5 + $0x194] sm:$0xf]
        %v353 = vld [vmem:[#allocation5 + $0x198] sm:$0xf]
        %v354 = vld [vmem:[#allocation5 + $0x19c] sm:$0xf]
        %v355 = vld [vmem:[#allocation5 + $0x1a0] sm:$0xf]
        %v356 = vld [vmem:[#allocation5 + $0x1a4] sm:$0xf]
        %v357 = vld [vmem:[#allocation5 + $0x1a8] sm:$0xf]
        %v358 = vld [vmem:[#allocation5 + $0x1ac] sm:$0xf]
        %v359 = vld [vmem:[#allocation5 + $0x1b0] sm:$0xf]
        %v360 = vld [vmem:[#allocation5 + $0x1b4] sm:$0xf]
        %v361 = vld [vmem:[#allocation5 + $0x1b8] sm:$0xf]
        %v362 = vld [vmem:[#allocation5 + $0x1bc] sm:$0xf]
        %v363 = vld [vmem:[#allocation5 + $0x1c0] sm:$0xf]
        %v364 = vld [vmem:[#allocation5 + $0x1c4] sm:$0xf]
        %v365 = vld [vmem:[#allocation5 + $0x1c8] sm:$0xf]
        %v366 = vld [vmem:[#allocation5 + $0x1cc] sm:$0xf]
        %v367 = vld [vmem:[#allocation5 + $0x1d0] sm:$0xf]
        %v368 = vld [vmem:[#allocation5 + $0x1d4] sm:$0xf]
        %v369 = vld [vmem:[#allocation5 + $0x1d8] sm:$0xf]
        %v370 = vld [vmem:[#allocation5 + $0x1dc] sm:$0xf]
        %v371 = vld [vmem:[#allocation5 + $0x1e0] sm:$0xf]
        %v372 = vld [vmem:[#allocation5 + $0x1e4] sm:$0xf]
        %v373 = vld [vmem:[#allocation5 + $0x1e8] sm:$0xf]
        %v374 = vld [vmem:[#allocation5 + $0x1ec] sm:$0xf]
        %v375 = vld [vmem:[#allocation5 + $0x1f0] sm:$0xf]
        %v376 = vld [vmem:[#allocation5 + $0x1f4] sm:$0xf]
        %v377 = vld [vmem:[#allocation5 + $0x1f8] sm:$0xf]
        %v378 = vld [vmem:[#allocation5 + $0x1fc] sm:$0xf]
        %v379 = vld [vmem:[#allocation5 + $0x200] sm:$0xf]
        %v380 = vld [vmem:[#allocation5 + $0x204] sm:$0xf]
        %v381 = vld [vmem:[#allocation5 + $0x208] sm:$0xf]
        %v382 = vld [vmem:[#allocation5 + $0x20c] sm:$0xf]
        %v383 = vld [vmem:[#allocation5 + $0x210] sm:$0xf]
        %v384 = vld [vmem:[#allocation5 + $0x214] sm:$0xf]
        %v385 = vld [vmem:[#allocation5 + $0x218] sm:$0xf]
        %v386 = vld [vmem:[#allocation5 + $0x21c] sm:$0xf]
        %v387 = vld [vmem:[#allocation5 + $0x220] sm:$0xf]
        %v388 = vld [vmem:[#allocation5 + $0x224] sm:$0xf]
        %v389 = vld [vmem:[#allocation5 + $0x228] sm:$0xf]
        %v390 = vld [vmem:[#allocation5 + $0x22c] sm:$0xf]
        %v391 = vld [vmem:[#allocation5 + $0x230] sm:$0xf]
        %v392 = vld [vmem:[#allocation5 + $0x234] sm:$0xf]
        %v393 = vld [vmem:[#allocation5 + $0x238] sm:$0xf]
        %v394 = vld [vmem:[#allocation5 + $0x23c] sm:$0xf]
        %v400 = vunpack.c.l.b16 %v246
        %v401 = vunpack.c.h.b16 %v246
        %v402 = vunpack.c.l.b16 %v247
        %v403 = vunpack.c.h.b16 %v247
        %v404 = vunpack.c.l.b16 %v248
        %v405 = vunpack.c.h.b16 %v248
        %v406 = vunpack.c.l.b16 %v249
        %v407 = vunpack.c.h.b16 %v249
        %v408 = vunpack.c.l.b16 %v250
        %v409 = vpack.c.b16 %v400, %v400
        %v410 = vpack.c.b16 %v401, %v401
        %v411 = vpack.c.b16 %v402, %v402
        %v412 = vpack.c.b16 %v403, %v403
        %v413 = vpack.c.b16 %v404, %v404
        %v414 = vpack.c.b16 %v405, %v405
        %v415 = vpack.c.b16 %v406, %v406
        %v416 = vpack.c.b16 %v407, %v407
        %v417 = vpack.c.b16 %v408, %v408
        %v571 = vunpack.c.l.b16 %v251
        %v572 = vunpack.c.l.b16 %v252
        %v573 = vunpack.c.l.b16 %v253
        %v574 = vunpack.c.l.b16 %v254
        %v575 = vunpack.c.l.b16 %v255
        %v576 = vunpack.c.l.b16 %v256
        %v577 = vunpack.c.l.b16 %v257
        %v578 = vunpack.c.l.b16 %v258
        %v579 = vunpack.c.l.b16 %v259
        %v580 = vunpack.c.l.b16 %v260
        %v581 = vunpack.c.l.b16 %v261
        %v582 = vunpack.c.l.b16 %v262
        %v583 = vunpack.c.l.b16 %v263
        %v584 = vunpack.c.l.b16 %v264
        %v585 = vunpack.c.l.b16 %v265
        %v586 = vunpack.c.l.b16 %v266
        %v587 = vunpack.c.l.b16 %v267
        %v588 = vunpack.c.l.b16 %v268
        %v589 = vunpack.c.l.b16 %v269
        %v590 = vunpack.c.l.b16 %v270
        %v591 = vunpack.c.l.b16 %v271
        %v592 = vunpack.c.l.b16 %v272
        %v593 = vunpack.c.l.b16 %v273
        %v594 = vunpack.c.l.b16 %v274
        %v595 = vunpack.c.l.b16 %v275
        %v596 = vunpack.c.l.b16 %v276
        %v597 = vunpack.c.l.b16 %v277
        %v598 = vunpack.c.l.b16 %v278
        %v599 = vunpack.c.l.b16 %v279
        %v600 = vunpack.c.l.b16 %v280
        %v601 = vunpack.c.l.b16 %v281
        %v602 = vunpack.c.l.b16 %v282
        %v603 = vunpack.c.l.b16 %v283
        %v604 = vunpack.c.l.b16 %v284
        %v605 = vunpack.c.l.b16 %v285
        %v606 = vunpack.c.l.b16 %v286
        %v607 = vunpack.c.l.b16 %v287
        %v608 = vunpack.c.l.b16 %v288
        %v609 = vunpack.c.l.b16 %v289
        %v610 = vunpack.c.l.b16 %v290
        %v611 = vunpack.c.l.b16 %v291
        %v612 = vunpack.c.l.b16 %v292
        %v613 = vunpack.c.l.b16 %v293
        %v614 = vunpack.c.l.b16 %v294
        %v615 = vunpack.c.l.b16 %v295
        %v616 = vunpack.c.l.b16 %v296
        %v617 = vunpack.c.l.b16 %v297
        %v618 = vunpack.c.l.b16 %v298
        %v619 = vunpack.c.l.b16 %v299
        %v620 = vunpack.c.l.b16 %v300
        %v621 = vunpack.c.l.b16 %v301
        %v622 = vunpack.c.l.b16 %v302
        %v623 = vunpack.c.l.b16 %v303
        %v624 = vunpack.c.l.b16 %v304
        %v625 = vunpack.c.l.b16 %v305
        %v626 = vunpack.c.l.b16 %v306
        %v627 = vunpack.c.l.b16 %v307
        %v628 = vunpack.c.l.b16 %v308
        %v629 = vunpack.c.l.b16 %v309
        %v630 = vunpack.c.l.b16 %v310
        %v631 = vunpack.c.l.b16 %v311
        %v632 = vunpack.c.l.b16 %v312
        %v633 = vunpack.c.l.b16 %v313
        %v634 = vunpack.c.l.b16 %v314
        %v635 = vunpack.c.l.b16 %v315
        %v636 = vunpack.c.l.b16 %v316
        %v637 = vunpack.c.l.b16 %v317
        %v638 = vunpack.c.l.b16 %v318
        %v639 = vunpack.c.l.b16 %v319
        %v640 = vunpack.c.l.b16 %v320
        %v641 = vunpack.c.l.b16 %v321
        %v642 = vunpack.c.l.b16 %v322
        %v643 = vunpack.c.l.b16 %v323
        %v644 = vunpack.c.l.b16 %v324
        %v645 = vunpack.c.l.b16 %v325
        %v646 = vunpack.c.l.b16 %v326
        %v647 = vunpack.c.l.b16 %v327
        %v648 = vunpack.c.l.b16 %v328
        %v649 = vunpack.c.l.b16 %v329
        %v650 = vunpack.c.l.b16 %v330
        %v651 = vunpack.c.l.b16 %v331
        %v652 = vunpack.c.l.b16 %v332
        %v653 = vunpack.c.l.b16 %v333
        %v654 = vunpack.c.l.b16 %v334
        %v655 = vunpack.c.l.b16 %v335
        %v656 = vunpack.c.l.b16 %v336
        %v657 = vunpack.c.l.b16 %v337
        %v658 = vunpack.c.l.b16 %v338
        %v659 = vunpack.c.l.b16 %v339
        %v660 = vunpack.c.l.b16 %v340
        %v661 = vunpack.c.l.b16 %v341
        %v662 = vunpack.c.l.b16 %v342
        %v663 = vunpack.c.l.b16 %v343
        %v664 = vunpack.c.l.b16 %v344
        %v665 = vunpack.c.l.b16 %v345
        %v666 = vunpack.c.l.b16 %v346
        %v667 = vunpack.c.l.b16 %v347
        %v668 = vunpack.c.l.b16 %v348
        %v669 = vunpack.c.l.b16 %v349
        %v670 = vunpack.c.l.b16 %v350
        %v671 = vunpack.c.l.b16 %v351
        %v672 = vunpack.c.l.b16 %v352
        %v673 = vunpack.c.l.b16 %v353
        %v674 = vunpack.c.l.b16 %v354
        %v675 = vunpack.c.l.b16 %v355
        %v676 = vunpack.c.l.b16 %v356
        %v677 = vunpack.c.l.b16 %v357
        %v678 = vunpack.c.l.b16 %v358
        %v679 = vunpack.c.l.b16 %v359
        %v680 = vunpack.c.l.b16 %v360
        %v681 = vunpack.c.l.b16 %v361
        %v682 = vunpack.c.l.b16 %v362
        %v683 = vunpack.c.l.b16 %v363
        %v684 = vunpack.c.l.b16 %v364
        %v685 = vunpack.c.l.b16 %v365
        %v686 = vunpack.c.l.b16 %v366
        %v687 = vunpack.c.l.b16 %v367
        %v688 = vunpack.c.l.b16 %v368
        %v689 = vunpack.c.l.b16 %v369
        %v690 = vunpack.c.l.b16 %v370
        %v691 = vunpack.c.l.b16 %v371
        %v692 = vunpack.c.l.b16 %v372
        %v693 = vunpack.c.l.b16 %v373
        %v694 = vunpack.c.l.b16 %v374
        %v695 = vunpack.c.l.b16 %v375
        %v696 = vunpack.c.l.b16 %v376
        %v697 = vunpack.c.l.b16 %v377
        %v698 = vunpack.c.l.b16 %v378
        %v699 = vunpack.c.l.b16 %v379
        %v700 = vunpack.c.l.b16 %v380
        %v701 = vunpack.c.l.b16 %v381
        %v702 = vunpack.c.l.b16 %v382
        %v703 = vunpack.c.l.b16 %v383
        %v704 = vunpack.c.l.b16 %v384
        %v705 = vunpack.c.l.b16 %v385
        %v706 = vunpack.c.l.b16 %v386
        %v707 = vunpack.c.l.b16 %v387
        %v708 = vunpack.c.l.b16 %v388
        %v709 = vunpack.c.l.b16 %v389
        %v710 = vunpack.c.l.b16 %v390
        %v711 = vunpack.c.l.b16 %v391
        %v712 = vunpack.c.l.b16 %v392
        %v713 = vunpack.c.l.b16 %v393
        %v714 = vunpack.c.l.b16 %v394
        %v715 = vpack.c.b16 %v572, %v571
        %v716 = vpack.c.b16 %v574, %v573
        %v717 = vpack.c.b16 %v576, %v575
        %v718 = vpack.c.b16 %v578, %v577
        %v719 = vpack.c.b16 %v580, %v579
        %v720 = vpack.c.b16 %v582, %v581
        %v721 = vpack.c.b16 %v584, %v583
        %v722 = vpack.c.b16 %v586, %v585
        %v723 = vpack.c.b16 %v588, %v587
        %v724 = vpack.c.b16 %v590, %v589
        %v725 = vpack.c.b16 %v592, %v591
        %v726 = vpack.c.b16 %v594, %v593
        %v727 = vpack.c.b16 %v596, %v595
        %v728 = vpack.c.b16 %v598, %v597
        %v729 = vpack.c.b16 %v600, %v599
        %v730 = vpack.c.b16 %v602, %v601
        %v731 = vpack.c.b16 %v604, %v603
        %v732 = vpack.c.b16 %v606, %v605
        %v733 = vpack.c.b16 %v608, %v607
        %v734 = vpack.c.b16 %v610, %v609
        %v735 = vpack.c.b16 %v612, %v611
        %v736 = vpack.c.b16 %v614, %v613
        %v737 = vpack.c.b16 %v616, %v615
        %v738 = vpack.c.b16 %v618, %v617
        %v739 = vpack.c.b16 %v620, %v619
        %v740 = vpack.c.b16 %v622, %v621
        %v741 = vpack.c.b16 %v624, %v623
        %v742 = vpack.c.b16 %v626, %v625
        %v743 = vpack.c.b16 %v628, %v627
        %v744 = vpack.c.b16 %v630, %v629
        %v745 = vpack.c.b16 %v632, %v631
        %v746 = vpack.c.b16 %v634, %v633
        %v747 = vpack.c.b16 %v636, %v635
        %v748 = vpack.c.b16 %v638, %v637
        %v749 = vpack.c.b16 %v640, %v639
        %v750 = vpack.c.b16 %v642, %v641
        %v751 = vpack.c.b16 %v644, %v643
        %v752 = vpack.c.b16 %v646, %v645
        %v753 = vpack.c.b16 %v648, %v647
        %v754 = vpack.c.b16 %v650, %v649
        %v755 = vpack.c.b16 %v652, %v651
        %v756 = vpack.c.b16 %v654, %v653
        %v757 = vpack.c.b16 %v656, %v655
        %v758 = vpack.c.b16 %v658, %v657
        %v759 = vpack.c.b16 %v660, %v659
        %v760 = vpack.c.b16 %v662, %v661
        %v761 = vpack.c.b16 %v664, %v663
        %v762 = vpack.c.b16 %v666, %v665
        %v763 = vpack.c.b16 %v668, %v667
        %v764 = vpack.c.b16 %v670, %v669
        %v765 = vpack.c.b16 %v672, %v671
        %v766 = vpack.c.b16 %v674, %v673
        %v767 = vpack.c.b16 %v676, %v675
        %v768 = vpack.c.b16 %v678, %v677
        %v769 = vpack.c.b16 %v680, %v679
        %v770 = vpack.c.b16 %v682, %v681
        %v771 = vpack.c.b16 %v684, %v683
        %v772 = vpack.c.b16 %v686, %v685
        %v773 = vpack.c.b16 %v688, %v687
        %v774 = vpack.c.b16 %v690, %v689
        %v775 = vpack.c.b16 %v692, %v691
        %v776 = vpack.c.b16 %v694, %v693
        %v777 = vpack.c.b16 %v696, %v695
        %v778 = vpack.c.b16 %v698, %v697
        %v779 = vpack.c.b16 %v700, %v699
        %v780 = vpack.c.b16 %v702, %v701
        %v781 = vpack.c.b16 %v704, %v703
        %v782 = vpack.c.b16 %v706, %v705
        %v783 = vpack.c.b16 %v708, %v707
        %v784 = vpack.c.b16 %v710, %v709
        %v785 = vpack.c.b16 %v712, %v711
        %v786 = vpack.c.b16 %v714, %v713
        %859 = vmatprep.subr.bf16.mxu0 0
        %860 = vmatpush1.bf16.msra.mxu0 %v722
        %861 = vmatprep.subr.bf16.mxu0 0
        %862 = vmatpush1.bf16.msra.mxu0 %v721
        %863 = vmatprep.subr.bf16.mxu0 0
        %864 = vmatpush1.bf16.msra.mxu0 %v720
        %865 = vmatprep.subr.bf16.mxu0 0
        %866 = vmatpush1.bf16.msra.mxu0 %v719
        %867 = vmatprep.subr.bf16.mxu0 0
        %868 = vmatpush1.bf16.msra.mxu0 %v718
        %869 = vmatprep.subr.bf16.mxu0 0
        %870 = vmatpush1.bf16.msra.mxu0 %v717
        %871 = vmatprep.subr.bf16.mxu0 0
        %872 = vmatpush1.bf16.msra.mxu0 %v716
        %873 = vmatprep.subr.bf16.mxu0 0
        %874 = vmatpush1.bf16.msra.mxu0 %v715
        %875 = vmatprep.subr.bf16.mxu0 0
        %876 = vmatpush2.bf16.msra.mxu0 %v730
        %877 = vmatprep.subr.bf16.mxu0 0
        %878 = vmatpush2.bf16.msra.mxu0 %v729
        %879 = vmatprep.subr.bf16.mxu0 0
        %880 = vmatpush2.bf16.msra.mxu0 %v728
        %881 = vmatprep.subr.bf16.mxu0 0
        %882 = vmatpush2.bf16.msra.mxu0 %v727
        %883 = vmatprep.subr.bf16.mxu0 0
        %884 = vmatpush2.bf16.msra.mxu0 %v726
        %885 = vmatprep.subr.bf16.mxu0 0
        %886 = vmatpush2.bf16.msra.mxu0 %v725
        %887 = vmatprep.subr.bf16.mxu0 0
        %888 = vmatpush2.bf16.msra.mxu0 %v724
        %889 = vmatprep.subr.bf16.mxu0 0
        %890 = vmatpush2.bf16.msra.mxu0 %v723
        %891 = vmatprep.mubr.bf16.mxu0 %v410
        %892 = vmatmul.mubr.bf16.gmra.mxu0 %v409
        %v893 = vpop.f32.mrf.mxu0
        %v894 = vadd.f32 0.0, %v893
        %v895 = vpop.f32.mrf.mxu0
        %v896 = vpop.f32.mrf.mxu0
        %v897 = vpop.f32.mrf.mxu0
        %898 = vdwg.mxu0
        %899 = vmatprep.subr.bf16.mxu0 0
        %900 = vmatpush1.bf16.msra.mxu0 %v738
        %901 = vmatprep.subr.bf16.mxu0 0
        %902 = vmatpush1.bf16.msra.mxu0 %v737
        %903 = vmatprep.subr.bf16.mxu0 0
        %904 = vmatpush1.bf16.msra.mxu0 %v736
        %905 = vmatprep.subr.bf16.mxu0 0
        %906 = vmatpush1.bf16.msra.mxu0 %v735
        %907 = vmatprep.subr.bf16.mxu0 0
        %908 = vmatpush1.bf16.msra.mxu0 %v734
        %909 = vmatprep.subr.bf16.mxu0 0
        %910 = vmatpush1.bf16.msra.mxu0 %v733
        %911 = vmatprep.subr.bf16.mxu0 0
        %912 = vmatpush1.bf16.msra.mxu0 %v732
        %913 = vmatprep.subr.bf16.mxu0 0
        %914 = vmatpush1.bf16.msra.mxu0 %v731
        %915 = vmatprep.subr.bf16.mxu0 0
        %916 = vmatpush2.bf16.msra.mxu0 %v746
        %917 = vmatprep.subr.bf16.mxu0 0
        %918 = vmatpush2.bf16.msra.mxu0 %v745
        %919 = vmatprep.subr.bf16.mxu0 0
        %920 = vmatpush2.bf16.msra.mxu0 %v744
        %921 = vmatprep.subr.bf16.mxu0 0
        %922 = vmatpush2.bf16.msra.mxu0 %v743
        %923 = vmatprep.subr.bf16.mxu0 0
        %924 = vmatpush2.bf16.msra.mxu0 %v742
        %925 = vmatprep.subr.bf16.mxu0 0
        %926 = vmatpush2.bf16.msra.mxu0 %v741
        %927 = vmatprep.subr.bf16.mxu0 0
        %928 = vmatpush2.bf16.msra.mxu0 %v740
        %929 = vmatprep.subr.bf16.mxu0 0
        %930 = vmatpush2.bf16.msra.mxu0 %v739
        %931 = vmatprep.mubr.bf16.mxu0 %v412
        %932 = vmatmul.mubr.bf16.gmra.mxu0 %v411
        %v933 = vpop.f32.mrf.mxu0
        %v934 = vadd.f32 %v894, %v933
        %v935 = vpop.f32.mrf.mxu0
        %v936 = vpop.f32.mrf.mxu0
        %v937 = vpop.f32.mrf.mxu0
        %938 = vdwg.mxu0
        %939 = vmatprep.subr.bf16.mxu0 0
        %940 = vmatpush1.bf16.msra.mxu0 %v754
        %941 = vmatprep.subr.bf16.mxu0 0
        %942 = vmatpush1.bf16.msra.mxu0 %v753
        %943 = vmatprep.subr.bf16.mxu0 0
        %944 = vmatpush1.bf16.msra.mxu0 %v752
        %945 = vmatprep.subr.bf16.mxu0 0
        %946 = vmatpush1.bf16.msra.mxu0 %v751
        %947 = vmatprep.subr.bf16.mxu0 0
        %948 = vmatpush1.bf16.msra.mxu0 %v750
        %949 = vmatprep.subr.bf16.mxu0 0
        %950 = vmatpush1.bf16.msra.mxu0 %v749
        %951 = vmatprep.subr.bf16.mxu0 0
        %952 = vmatpush1.bf16.msra.mxu0 %v748
        %953 = vmatprep.subr.bf16.mxu0 0
        %954 = vmatpush1.bf16.msra.mxu0 %v747
        %955 = vmatprep.subr.bf16.mxu0 0
        %956 = vmatpush2.bf16.msra.mxu0 %v762
        %957 = vmatprep.subr.bf16.mxu0 0
        %958 = vmatpush2.bf16.msra.mxu0 %v761
        %959 = vmatprep.subr.bf16.mxu0 0
        %960 = vmatpush2.bf16.msra.mxu0 %v760
        %961 = vmatprep.subr.bf16.mxu0 0
        %962 = vmatpush2.bf16.msra.mxu0 %v759
        %963 = vmatprep.subr.bf16.mxu0 0
        %964 = vmatpush2.bf16.msra.mxu0 %v758
        %965 = vmatprep.subr.bf16.mxu0 0
        %966 = vmatpush2.bf16.msra.mxu0 %v757
        %967 = vmatprep.subr.bf16.mxu0 0
        %968 = vmatpush2.bf16.msra.mxu0 %v756
        %969 = vmatprep.subr.bf16.mxu0 0
        %970 = vmatpush2.bf16.msra.mxu0 %v755
        %971 = vmatprep.mubr.bf16.mxu0 %v414
        %972 = vmatmul.mubr.bf16.gmra.mxu0 %v413
        %v973 = vpop.f32.mrf.mxu0
        %v974 = vadd.f32 %v934, %v973
        %v975 = vpop.f32.mrf.mxu0
        %v976 = vpop.f32.mrf.mxu0
        %v977 = vpop.f32.mrf.mxu0
        %978 = vdwg.mxu0
        %979 = vmatprep.subr.bf16.mxu0 0
        %980 = vmatpush1.bf16.msra.mxu0 %v770
        %981 = vmatprep.subr.bf16.mxu0 0
        %982 = vmatpush1.bf16.msra.mxu0 %v769
        %983 = vmatprep.subr.bf16.mxu0 0
        %984 = vmatpush1.bf16.msra.mxu0 %v768
        %985 = vmatprep.subr.bf16.mxu0 0
        %986 = vmatpush1.bf16.msra.mxu0 %v767
        %987 = vmatprep.subr.bf16.mxu0 0
        %988 = vmatpush1.bf16.msra.mxu0 %v766
        %989 = vmatprep.subr.bf16.mxu0 0
        %990 = vmatpush1.bf16.msra.mxu0 %v765
        %991 = vmatprep.subr.bf16.mxu0 0
        %992 = vmatpush1.bf16.msra.mxu0 %v764
        %993 = vmatprep.subr.bf16.mxu0 0
        %994 = vmatpush1.bf16.msra.mxu0 %v763
        %995 = vmatprep.subr.bf16.mxu0 0
        %996 = vmatpush2.bf16.msra.mxu0 %v778
        %997 = vmatprep.subr.bf16.mxu0 0
        %998 = vmatpush2.bf16.msra.mxu0 %v777
        %999 = vmatprep.subr.bf16.mxu0 0
        %1000 = vmatpush2.bf16.msra.mxu0 %v776
        %1001 = vmatprep.subr.bf16.mxu0 0
        %1002 = vmatpush2.bf16.msra.mxu0 %v775
        %1003 = vmatprep.subr.bf16.mxu0 0
        %1004 = vmatpush2.bf16.msra.mxu0 %v774
        %1005 = vmatprep.subr.bf16.mxu0 0
        %1006 = vmatpush2.bf16.msra.mxu0 %v773
        %1007 = vmatprep.subr.bf16.mxu0 0
        %1008 = vmatpush2.bf16.msra.mxu0 %v772
        %1009 = vmatprep.subr.bf16.mxu0 0
        %1010 = vmatpush2.bf16.msra.mxu0 %v771
        %1011 = vmatprep.mubr.bf16.mxu0 %v416
        %1012 = vmatmul.mubr.bf16.gmra.mxu0 %v415
        %v1013 = vpop.f32.mrf.mxu0
        %v1014 = vadd.f32 %v974, %v1013
        %v1015 = vpop.f32.mrf.mxu0
        %v1016 = vpop.f32.mrf.mxu0
        %v1017 = vpop.f32.mrf.mxu0
        %1018 = vdwg.mxu0
        %1019 = vmatprep.subr.bf16.mxu0 0
        %1020 = vmatpush1.bf16.msra.mxu0 %v786
        %1021 = vmatprep.subr.bf16.mxu0 0
        %1022 = vmatpush1.bf16.msra.mxu0 %v785
        %1023 = vmatprep.subr.bf16.mxu0 0
        %1024 = vmatpush1.bf16.msra.mxu0 %v784
        %1025 = vmatprep.subr.bf16.mxu0 0
        %1026 = vmatpush1.bf16.msra.mxu0 %v783
        %1027 = vmatprep.subr.bf16.mxu0 0
        %1028 = vmatpush1.bf16.msra.mxu0 %v782
        %1029 = vmatprep.subr.bf16.mxu0 0
        %1030 = vmatpush1.bf16.msra.mxu0 %v781
        %1031 = vmatprep.subr.bf16.mxu0 0
        %1032 = vmatpush1.bf16.msra.mxu0 %v780
        %1033 = vmatprep.subr.bf16.mxu0 0
        %1034 = vmatpush1.bf16.msra.mxu0 %v779
        %1035 = vmatprep.subr.bf16.mxu0 0
        %1036 = vmatpush2.bf16.msra.mxu0 0
        %1037 = vmatprep.subr.bf16.mxu0 0
        %1038 = vmatpush2.bf16.msra.mxu0 0
        %1039 = vmatprep.subr.bf16.mxu0 0
        %1040 = vmatpush2.bf16.msra.mxu0 0
        %1041 = vmatprep.subr.bf16.mxu0 0
        %1042 = vmatpush2.bf16.msra.mxu0 0
        %1043 = vmatprep.subr.bf16.mxu0 0
        %1044 = vmatpush2.bf16.msra.mxu0 0
        %1045 = vmatprep.subr.bf16.mxu0 0
        %1046 = vmatpush2.bf16.msra.mxu0 0
        %1047 = vmatprep.subr.bf16.mxu0 0
        %1048 = vmatpush2.bf16.msra.mxu0 0
        %1049 = vmatprep.subr.bf16.mxu0 0
        %1050 = vmatpush2.bf16.msra.mxu0 0
        %1051 = vmatprep.mubr.bf16.mxu0 0
        %1052 = vmatmul.mubr.bf16.gmra.mxu0 %v417
        %v1053 = vpop.f32.mrf.mxu0
        %v1054 = vadd.f32 %v1014, %v1053
        %v1055 = vpop.f32.mrf.mxu0
        %v1056 = vpop.f32.mrf.mxu0
        %v1057 = vpop.f32.mrf.mxu0
        %1058 = vdwg.mxu0
        %v1059 = vrot.slane %v1054, 4
        %v1060 = vadd.f32 %v1054, %v1059
        %v1061 = vrot.slane %v1060, 2
        %v1062 = vadd.f32 %v1060, %v1061
        %v1063 = vrot.slane %v1062, 1
        %v1064 = vadd.f32 %v1062, %v1063
        %1065 = vst [vmem:[%s238] sm:$0x1] %v1064
        %v1066 = vmul.f32 %v1054, %v1054
        %v1067 = vrot.slane %v1066, 4
        %v1068 = vadd.f32 %v1066, %v1067
        %v1069 = vrot.slane %v1068, 2
        %v1070 = vadd.f32 %v1068, %v1069
        %v1071 = vrot.slane %v1070, 1
        %v1072 = vadd.f32 %v1070, %v1071
        %1073 = vst [vmem:[%s244] sm:$0x1] %v1072
        %v1074 = vpack.c.bf16 %v1054, %v1054
        %1075 = vst [vmem:[%s232] sm:$0xf] %v1074
        %s1076 = sand.u32 %s81, 1
        %s1077 = scalar_lea.sflag [#allocation4], %s1076
        %s1078 = sand.u32 %s81, 1
        %s1079 = smul.addr %s1078, 4
        %s1080 = scalar_lea.vmem [#allocation7], %s1079
        %s1081 = sand.u32 %s26, 1
        %s1082 = scalar_lea.sflag [#allocation9], %s1081
        %s1083 = sand.u32 %s107, 1
        %s1084 = scalar_lea.vmem [#allocation8], %s1083
        %s1085 = sand.u32 %s26, 1
        %s1086 = scalar_lea.sflag [#allocation9], %s1085
        %s1087 = sand.u32 %s133, 1
        %s1088 = scalar_lea.vmem [#allocation10], %s1087
        // Predicated region
        $region37: #{tpu_custom_call.1} parent=27 // pred_check
          %p1089 = pneg %p91
        $region38: #{tpu_custom_call.1} parent=27 // pred_check_branch
          %1091 = sbr.rel (%p1089) target = $region40
        $region39: #{tpu_custom_call.1} parent=27 // pred_region
          %s1093 = ssub.s32 64, 64
          %1094 = vsyncadd %s1077, %s1093
          %s1095 = smul.addr %s26, 64
          %s1096 = scalar_lea.hbm %s2, %s1095
          %s1098 = sshll.u32 %s1080, 4
          %s1099 = int_to_ptr.vmem [resolvable:$true] %s1098
          %1101 = dma.vmem_to_hbm [thread:$0]  %s1099, 64, %s1096, %s1077
        $region40: #{tpu_custom_call.1} parent=27 // pred_fallthru
          _
        // Predicated region
        $region41: #{tpu_custom_call.1} parent=27 // pred_check
          %p1102 = pneg %p117
        $region42: #{tpu_custom_call.1} parent=27 // pred_check_branch
          %1104 = sbr.rel (%p1102) target = $region44
        $region43: #{tpu_custom_call.1} parent=27 // pred_region
          %s1106 = ssub.s32 16, 16
          %1107 = vsyncadd %s1082, %s1106
          %s1108 = smul.addr %s26, 16
          %s1109 = scalar_lea.hbm %s3, %s1108
          %s1111 = sshll.u32 %s1084, 4
          %s1112 = int_to_ptr.vmem [resolvable:$true] %s1111
          %1114 = dma.vmem_to_hbm [thread:$0]  %s1112, 16, %s1109, %s1082
        $region44: #{tpu_custom_call.1} parent=27 // pred_fallthru
          _
        // Predicated region
        $region45: #{tpu_custom_call.1} parent=27 // pred_check
          %p1115 = pneg %p143
        $region46: #{tpu_custom_call.1} parent=27 // pred_check_branch
          %1117 = sbr.rel (%p1115) target = $region48
        $region47: #{tpu_custom_call.1} parent=27 // pred_region
          %s1119 = ssub.s32 16, 16
          %1120 = vsyncadd %s1086, %s1119
          %s1121 = smul.addr %s26, 16
          %s1122 = scalar_lea.hbm %s4, %s1121
          %s1124 = sshll.u32 %s1088, 4
          %s1125 = int_to_ptr.vmem [resolvable:$true] %s1124
          %1127 = dma.vmem_to_hbm [thread:$0]  %s1125, 16, %s1122, %s1086
        $region48: #{tpu_custom_call.1} parent=27 // pred_fallthru
          _
      $region28: #{tpu_custom_call.1} parent=5 // pred_fallthru
        _
      %p1128 = scmp.le.s32.totalorder 2, %s21
      // Predicated region
      $region49: #{tpu_custom_call.1} parent=5 // pred_check
        %p1129 = pneg %p1128
      $region50: #{tpu_custom_call.1} parent=5 // pred_check_branch
        %1131 = sbr.rel (%p1129) target = $region52
      $region51: #{tpu_custom_call.1} parent=5 // pred_region
        %s1132 = ssub.s32 %s21, 2
        // Predicated region
        $region53: #{tpu_custom_call.1} parent=51 // pred_check
          %p1133 = pneg %p97
        $region54: #{tpu_custom_call.1} parent=51 // pred_check_branch
          %1135 = sbr.rel (%p1133) target = $region56
        $region55: #{tpu_custom_call.1} parent=51 // pred_region
          %s1136 = sand.u32 %s82, 1
          %s1137 = scalar_lea.sflag [#allocation4], %s1136
          %s1138 = sand.u32 %s82, 1
          %s1139 = smul.addr %s1138, 4
          %s1140 = scalar_lea.vmem [#allocation7], %s1139
          %1141 = dma.done %s1137, 64
        $region56: #{tpu_custom_call.1} parent=51 // pred_fallthru
          _
        // Predicated region
        $region57: #{tpu_custom_call.1} parent=51 // pred_check
          %p1142 = pneg %p123
        $region58: #{tpu_custom_call.1} parent=51 // pred_check_branch
          %1144 = sbr.rel (%p1142) target = $region60
        $region59: #{tpu_custom_call.1} parent=51 // pred_region
          %s1145 = sand.u32 %s27, 1
          %s1146 = scalar_lea.sflag [#allocation9], %s1145
          %s1147 = sand.u32 %s108, 1
          %s1148 = scalar_lea.vmem [#allocation8], %s1147
          %1149 = dma.done %s1146, 16
        $region60: #{tpu_custom_call.1} parent=51 // pred_fallthru
          _
        // Predicated region
        $region61: #{tpu_custom_call.1} parent=51 // pred_check
          %p1150 = pneg %p149
        $region62: #{tpu_custom_call.1} parent=51 // pred_check_branch
          %1152 = sbr.rel (%p1150) target = $region64
        $region63: #{tpu_custom_call.1} parent=51 // pred_region
          %s1153 = sand.u32 %s27, 1
          %s1154 = scalar_lea.sflag [#allocation9], %s1153
          %s1155 = sand.u32 %s134, 1
          %s1156 = scalar_lea.vmem [#allocation10], %s1155
          %1157 = dma.done %s1154, 16
        $region64: #{tpu_custom_call.1} parent=51 // pred_fallthru
          _
      $region52: #{tpu_custom_call.1} parent=5 // pred_fallthru
        _
    $region6: #{tpu_custom_call.1} parent=1 // loop_footer
      %s25 = sadd.s32 1, %s21
    $region7: #{tpu_custom_call.1} parent=1 // loop_footer_branch
      %20 = sbr.rel target = $region3
    $region8: #{tpu_custom_call.1} parent=1 // loop_exit
      _
    %1158 = vsyncpa [#allocation3], 1
    %s1159 = scalar_lea.sflag [#allocation3], 1
    %1160 = vsyncpa %s1159, 1
    %1161 = vsyncpa [#allocation6], 1
    %1162 = vsyncpa [#allocation4], 1
    %s1163 = scalar_lea.sflag [#allocation4], 1
    %1164 = vsyncpa %s1163, 1
    %1165 = vsyncpa [#allocation9], 1
    %s1166 = scalar_lea.sflag [#allocation9], 1
    %1167 = vsyncpa %s1166, 1

</llo_original>
